<compile_context>
chip_gen: v6e
topology: v6e:2x2x1
jax: 0.10.0
libtpu: 0.0.40
codegen_flags: <defaults>
</compile_context>

<pallas_src>
import jax
import jax.numpy as jnp
from jax import lax
from jax.experimental import pallas as pl
from jax.experimental.pallas import tpu as pltpu

IN_DIM, HID, OUT = 2, 64, 256


def _round_up(x, m):
    return (x + m - 1) // m * m


def future_encoder_kernel(x_ref, w1_ref, b1_ref, w2_ref, b2_ref, o_ref):
    # x_ref : (tt, 2, tba) f32   -- BA on lanes (dense), feature axis on sublanes
    # w1_ref: (HID, 2)  f32      -- layer-1 weight, transposed
    # b1_ref: (HID, 1)  f32
    # w2_ref: (OUT, HID) bf16    -- layer-2 weight, transposed (MXU lhs)
    # b2_ref: (OUT, 1)  f32
    # o_ref : (OUT, tba) f32     -- running max, resident across the T grid axis
    t_blk = pl.program_id(1)
    tt = x_ref.shape[0]
    tba = x_ref.shape[2]

    # Loop-invariant broadcasts of the tiny layer-1 params (hoisted: JAX does not
    # CSE broadcast_in_dim inside the loop).
    w1b0 = jnp.broadcast_to(w1_ref[:, 0:1], (HID, tba))
    w1b1 = jnp.broadcast_to(w1_ref[:, 1:2], (HID, tba))
    b1b = jnp.broadcast_to(b1_ref[...], (HID, tba))
    w2t = w2_ref[...]                                      # (OUT, HID) bf16

    def step(t):
        xt = x_ref[t]                                      # (2, tba)
        # Layer 1 (2 -> 64) on the VPU: two broadcast FMAs (K=2 is not MXU work).
        h = xt[0:1, :] * w1b0 + xt[1:2, :] * w1b1 + b1b    # (HID, tba) f32
        h = jnp.maximum(h, 0.0)                            # ReLU (f32: v5e-safe)
        # Layer 2 (64 -> 256) on the MXU: bf16 inputs, f32 accumulate.
        # K=64 => ~25% MXU PE util on v6e/v7x; inherent to the model, don't chase.
        return jnp.dot(w2t, h.astype(jnp.bfloat16),
                       preferred_element_type=jnp.float32)  # (OUT, tba) f32

    # Max over this block's tt timesteps; intermediate stays O(tba*256).
    acc = step(0)
    if tt > 1:
        acc = lax.fori_loop(1, tt, lambda t, a: jnp.maximum(a, step(t)), acc)

    # Running max across T grid steps (no -inf init pass).
    @pl.when(t_blk == 0)
    def _():
        o_ref[...] = acc

    @pl.when(t_blk > 0)
    def _():
        o_ref[...] = jnp.maximum(o_ref[...], acc)

    # Bias is constant along T so it commutes with the max: add exactly once,
    # after the final running-max update.
    @pl.when(t_blk == pl.num_programs(1) - 1)
    def _():
        o_ref[...] = o_ref[...] + b2_ref[...]


def future_encoder(current_states, params, *, tba=None, tt=None):
    """current_states: [B, A, T, 2] -> [B, A, 256] (float32)."""
    B, A, T, D = current_states.shape
    assert D == IN_DIM
    BA = B * A
    w1, b1, w2, b2 = params

    # --- tile selection -------------------------------------------------------
    # tba: lane tile (multiple of 128).  128 for small/medium BA so the "parallel"
    # BA axis gets >=2 blocks as soon as BA > 128 (v7x dual TensorCore); 256 above.
    if tba is None:
        tba = 128 if BA <= 256 else 256
    tba = max(128, _round_up(tba, 128))
    BA_pad = _round_up(BA, tba)

    # tt: timesteps per grid step.  Not one of the last two block dims, so it is
    # unconstrained; pick it so T padding (wasted MXU FLOPs) is avoided.
    if tt is None:
        if T <= 64:
            tt = T
        else:
            divs = [d for d in range(16, 65) if T % d == 0]
            tt = max(divs) if divs else 32
    tt = max(1, min(tt, T))
    T_pad = _round_up(T, tt)

    # --- data prep --------------------------------------------------------------
    # [B,A,T,2] -> [T, 2, BA]: BA becomes the minor (lane) dim, giving contiguous
    # tba*4-byte DMA rows and a lane-dense VMEM tile.
    x = jnp.transpose(current_states.reshape(BA, T, D), (1, 2, 0)).astype(jnp.float32)
    if T_pad != T:                       # edge replication is max-invariant
        x = jnp.pad(x, ((0, T_pad - T), (0, 0), (0, 0)), mode="edge")
    if BA_pad != BA:                     # zero columns are sliced off below
        x = jnp.pad(x, ((0, 0), (0, 0), (0, BA_pad - BA)))

    w1t = w1.T.astype(jnp.float32)                  # (HID, 2)
    b1t = b1.reshape(HID, 1).astype(jnp.float32)
    w2t = w2.T.astype(jnp.bfloat16)                 # (OUT, HID) - MXU is bf16-native
    b2t = b2.reshape(OUT, 1).astype(jnp.float32)

    grid = (BA_pad // tba, T_pad // tt)

    flops = 2 * BA_pad * T_pad * (IN_DIM * HID + HID * OUT)
    bytes_accessed = (BA_pad * T_pad * IN_DIM * 4 + BA_pad * OUT * 4
                      + (HID * IN_DIM + HID + OUT) * 4 + OUT * HID * 2)

    out = pl.pallas_call(
        future_encoder_kernel,
        out_shape=jax.ShapeDtypeStruct((OUT, BA_pad), jnp.float32),
        grid=grid,
        in_specs=[
            pl.BlockSpec((tt, IN_DIM, tba), lambda i, t: (t, 0, i)),
            pl.BlockSpec((HID, IN_DIM), lambda i, t: (0, 0)),
            pl.BlockSpec((HID, 1), lambda i, t: (0, 0)),
            pl.BlockSpec((OUT, HID), lambda i, t: (0, 0)),
            pl.BlockSpec((OUT, 1), lambda i, t: (0, 0)),
        ],
        out_specs=pl.BlockSpec((OUT, tba), lambda i, t: (0, i)),
        compiler_params=pltpu.CompilerParams(
            dimension_semantics=("parallel", "arbitrary"),
            vmem_limit_bytes=32 * 1024 * 1024,     # densified tiles stay far below this
        ),
        cost_estimate=pl.CostEstimate(
            flops=flops, transcendentals=0, bytes_accessed=bytes_accessed),
    )(x, w1t, b1t, w2t, b2t)

    # (OUT, BA_pad) -> (B, A, OUT)
    return out[:, :BA].T.reshape(B, A, OUT)


def init_params(key):
    """Deterministic init matching PyTorch nn.Linear default (U[-1/sqrt(fan_in), +])."""
    k1, k2, k3, k4 = jax.random.split(key, 4)
    bound1 = 1.0 / (IN_DIM ** 0.5)
    bound2 = 1.0 / (HID ** 0.5)
    w1 = jax.random.uniform(k1, (IN_DIM, HID), jnp.float32, -bound1, bound1)
    b1 = jax.random.uniform(k2, (HID,), jnp.float32, -bound1, bound1)
    w2 = jax.random.uniform(k3, (HID, OUT), jnp.float32, -bound2, bound2)
    b2 = jax.random.uniform(k4, (OUT,), jnp.float32, -bound2, bound2)
    return w1, b1, w2, b2


def reference(current_states, params):
    """Pure-JAX (f32) reference matching the PyTorch semantics."""
    w1, b1, w2, b2 = params
    h = jnp.maximum(current_states @ w1 + b1, 0.0)
    y = h @ w2 + b2
    return jnp.max(y, axis=-2)


if __name__ == "__main__":
    key = jax.random.PRNGKey(0)
    k_params, k_x = jax.random.split(key)

    # Small shapes: batch=2, agents=3, timesteps=20, features=2.
    B, A, T = 2, 3, 20
    current_states = jax.random.normal(k_x, (B, A, T, IN_DIM), jnp.float32)
    params = init_params(k_params)
    ref = reference(current_states, params)

    # Default tiling: tt = T (single T grid step, no T padding).
    out = jax.block_until_ready(future_encoder(current_states, params))
    assert out.shape == (B, A, OUT), out.shape
    # Layer 2 runs in bf16 on the MXU (f32 accumulate) -> loosened tolerance.
    assert jnp.allclose(out, ref, atol=2e-2, rtol=2e-2), "mismatch (default tiling)"

    # Forced multi-step T axis: exercises the running-max accumulator, the
    # t==0 / t>0 / t==last pl.when paths and max-safe edge padding (T=20 -> 24).
    out2 = jax.block_until_ready(future_encoder(current_states, params, tba=128, tt=8))
    assert jnp.allclose(out2, ref, atol=2e-2, rtol=2e-2), "mismatch (tt=8 tiling)"

    print("KERNEL_OK")
</pallas_src>

<mosaic_0001>
module attributes {stable_mosaic.version = 11 : i64} {
  func.func @future_encoder_kernel(%arg0: i32, %arg1: i32, %arg2: memref<20x2x128xf32, #tpu.memory_space<vmem>>, %arg3: memref<64x2xf32, #tpu.memory_space<vmem>>, %arg4: memref<64x1xf32, #tpu.memory_space<vmem>>, %arg5: memref<256x64xbf16, #tpu.memory_space<vmem>>, %arg6: memref<256x1xf32, #tpu.memory_space<vmem>>, %arg7: memref<256x128xf32, #tpu.memory_space<vmem>>) attributes {dimension_semantics = [#tpu.dimension_semantics<parallel>, #tpu.dimension_semantics<arbitrary>], iteration_bounds = array<i64: 1, 1>, scalar_prefetch = 0 : i64, scratch_operands = 0 : i64, tpu.core_type = #tpu.core_type<tc>, window_params = [{transform_indices = @transform_0, window_bounds = array<i64: 20, 2, 128>}, {pipeline_mode = #tpu.pipeline_mode<synchronous>, transform_indices = @transform_1, window_bounds = array<i64: 64, 2>}, {pipeline_mode = #tpu.pipeline_mode<synchronous>, transform_indices = @transform_2, window_bounds = array<i64: 64, 1>}, {pipeline_mode = #tpu.pipeline_mode<synchronous>, transform_indices = @transform_3, window_bounds = array<i64: 256, 64>}, {pipeline_mode = #tpu.pipeline_mode<synchronous>, transform_indices = @transform_4, window_bounds = array<i64: 256, 1>}, {transform_indices = @transform_5, window_bounds = array<i64: 256, 128>}]} {
    %c0 = arith.constant 0 : index
    %c0_0 = arith.constant 0 : index
    %0 = vector.load %arg3[%c0, %c0_0] : memref<64x2xf32, #tpu.memory_space<vmem>>, vector<64x1xf32>
    %1 = vector.shape_cast %0 : vector<64x1xf32> to vector<64x1xf32>
    %2 = vector.broadcast %1 : vector<64x1xf32> to vector<64x128xf32>
    %c0_1 = arith.constant 0 : index
    %c1 = arith.constant 1 : index
    %3 = vector.load %arg3[%c0_1, %c1] : memref<64x2xf32, #tpu.memory_space<vmem>>, vector<64x1xf32>
    %4 = vector.shape_cast %3 : vector<64x1xf32> to vector<64x1xf32>
    %5 = vector.broadcast %4 : vector<64x1xf32> to vector<64x128xf32>
    %c0_2 = arith.constant 0 : index
    %c0_3 = arith.constant 0 : index
    %6 = vector.load %arg4[%c0_2, %c0_3] : memref<64x1xf32, #tpu.memory_space<vmem>>, vector<64x1xf32>
    %7 = vector.shape_cast %6 : vector<64x1xf32> to vector<64x1xf32>
    %8 = vector.broadcast %7 : vector<64x1xf32> to vector<64x128xf32>
    %c0_4 = arith.constant 0 : index
    %c0_5 = arith.constant 0 : index
    %9 = vector.load %arg5[%c0_4, %c0_5] : memref<256x64xbf16, #tpu.memory_space<vmem>>, vector<256x64xbf16>
    %c0_6 = arith.constant 0 : index
    %c0_7 = arith.constant 0 : index
    %c0_8 = arith.constant 0 : index
    %10 = vector.load %arg2[%c0_6, %c0_7, %c0_8] : memref<20x2x128xf32, #tpu.memory_space<vmem>>, vector<1x2x128xf32>
    %11 = vector.shape_cast %10 : vector<1x2x128xf32> to vector<2x128xf32>
    %12 = vector.extract_strided_slice %11 {offsets = [0, 0], sizes = [1, 128], strides = [1, 1]} : vector<2x128xf32> to vector<1x128xf32>
    %13 = vector.broadcast %12 : vector<1x128xf32> to vector<64x128xf32>
    %14 = arith.mulf %13, %2 : vector<64x128xf32>
    %15 = vector.extract_strided_slice %11 {offsets = [1, 0], sizes = [1, 128], strides = [1, 1]} : vector<2x128xf32> to vector<1x128xf32>
    %16 = vector.broadcast %15 : vector<1x128xf32> to vector<64x128xf32>
    %17 = arith.mulf %16, %5 : vector<64x128xf32>
    %18 = arith.addf %14, %17 : vector<64x128xf32>
    %19 = arith.addf %18, %8 : vector<64x128xf32>
    %cst = arith.constant 0.000000e+00 : f32
    %20 = vector.broadcast %cst : f32 to vector<64x128xf32>
    %21 = arith.maximumf %19, %20 : vector<64x128xf32>
    %22 = arith.truncf %21 : vector<64x128xf32> to vector<64x128xbf16>
    %cst_9 = arith.constant dense<0.000000e+00> : vector<256x128xf32>
    %23 = tpu.matmul %9, %22, %cst_9 {dimension_numbers = #tpu.dot_dimension_numbers<[1], [0], [0], [1], [0, 0, 1, 1], [], []>} : vector<256x64xbf16>, vector<64x128xbf16>, vector<256x128xf32> -> vector<256x128xf32>
    %c1_i32 = arith.constant 1 : i32
    %c19_i32 = arith.constant 19 : i32
    %24 = arith.addi %c1_i32, %c19_i32 : i32
    %c1_i32_10 = arith.constant 1 : i32
    %25 = scf.for %arg8 = %c1_i32 to %24 step %c1_i32_10 iter_args(%arg9 = %23) -> (vector<256x128xf32>)  : i32 {
      %35 = arith.index_cast %arg8 : i32 to index
      %c0_17 = arith.constant 0 : index
      %c0_18 = arith.constant 0 : index
      %36 = vector.load %arg2[%35, %c0_17, %c0_18] : memref<20x2x128xf32, #tpu.memory_space<vmem>>, vector<1x2x128xf32>
      %37 = vector.shape_cast %36 : vector<1x2x128xf32> to vector<2x128xf32>
      %38 = vector.extract_strided_slice %37 {offsets = [0, 0], sizes = [1, 128], strides = [1, 1]} : vector<2x128xf32> to vector<1x128xf32>
      %39 = vector.broadcast %38 : vector<1x128xf32> to vector<64x128xf32>
      %40 = arith.mulf %39, %2 : vector<64x128xf32>
      %41 = vector.extract_strided_slice %37 {offsets = [1, 0], sizes = [1, 128], strides = [1, 1]} : vector<2x128xf32> to vector<1x128xf32>
      %42 = vector.broadcast %41 : vector<1x128xf32> to vector<64x128xf32>
      %43 = arith.mulf %42, %5 : vector<64x128xf32>
      %44 = arith.addf %40, %43 : vector<64x128xf32>
      %45 = arith.addf %44, %8 : vector<64x128xf32>
      %cst_19 = arith.constant 0.000000e+00 : f32
      %46 = vector.broadcast %cst_19 : f32 to vector<64x128xf32>
      %47 = arith.maximumf %45, %46 : vector<64x128xf32>
      %48 = arith.truncf %47 : vector<64x128xf32> to vector<64x128xbf16>
      %cst_20 = arith.constant dense<0.000000e+00> : vector<256x128xf32>
      %49 = tpu.matmul %9, %48, %cst_20 {dimension_numbers = #tpu.dot_dimension_numbers<[1], [0], [0], [1], [0, 0, 1, 1], [], []>} : vector<256x64xbf16>, vector<64x128xbf16>, vector<256x128xf32> -> vector<256x128xf32>
      %50 = arith.maximumf %arg9, %49 : vector<256x128xf32>
      scf.yield %50 : vector<256x128xf32>
    }
    %c19_i32_11 = arith.constant 19 : i32
    %c0_i32 = arith.constant 0 : i32
    %26 = arith.cmpi eq, %arg1, %c0_i32 : i32
    %27 = arith.extui %26 : i1 to i32
    %c0_i32_12 = arith.constant 0 : i32
    %28 = arith.cmpi ne, %27, %c0_i32_12 : i32
    scf.if %28 {
      %c0_17 = arith.constant 0 : index
      %c0_18 = arith.constant 0 : index
      %35 = vector.load %arg7[%c0_17, %c0_18] : memref<256x128xf32, #tpu.memory_space<vmem>>, vector<256x128xf32>
      tpu.vector_store %arg7[%c0_17, %c0_18], %25 {strides = array<i32>} : memref<256x128xf32, #tpu.memory_space<vmem>>, vector<256x128xf32>,
    } else {
    }
    %c0_i32_13 = arith.constant 0 : i32
    %29 = arith.cmpi sgt, %arg1, %c0_i32_13 : i32
    %30 = arith.extui %29 : i1 to i32
    %c0_i32_14 = arith.constant 0 : i32
    %31 = arith.cmpi ne, %30, %c0_i32_14 : i32
    scf.if %31 {
      %c0_17 = arith.constant 0 : index
      %c0_18 = arith.constant 0 : index
      %35 = vector.load %arg7[%c0_17, %c0_18] : memref<256x128xf32, #tpu.memory_space<vmem>>, vector<256x128xf32>
      %36 = arith.maximumf %35, %25 : vector<256x128xf32>
      %c0_19 = arith.constant 0 : index
      %c0_20 = arith.constant 0 : index
      %37 = vector.load %arg7[%c0_19, %c0_20] : memref<256x128xf32, #tpu.memory_space<vmem>>, vector<256x128xf32>
      tpu.vector_store %arg7[%c0_19, %c0_20], %36 {strides = array<i32>} : memref<256x128xf32, #tpu.memory_space<vmem>>, vector<256x128xf32>,
    } else {
    }
    %c0_i32_15 = arith.constant 0 : i32
    %32 = arith.cmpi eq, %arg1, %c0_i32_15 : i32
    %33 = arith.extui %32 : i1 to i32
    %c0_i32_16 = arith.constant 0 : i32
    %34 = arith.cmpi ne, %33, %c0_i32_16 : i32
    scf.if %34 {
      %c0_17 = arith.constant 0 : index
      %c0_18 = arith.constant 0 : index
      %35 = vector.load %arg7[%c0_17, %c0_18] : memref<256x128xf32, #tpu.memory_space<vmem>>, vector<256x128xf32>
      %c0_19 = arith.constant 0 : index
      %c0_20 = arith.constant 0 : index
      %36 = vector.load %arg6[%c0_19, %c0_20] : memref<256x1xf32, #tpu.memory_space<vmem>>, vector<256x1xf32>
      %37 = vector.broadcast %36 : vector<256x1xf32> to vector<256x128xf32>
      %38 = arith.addf %35, %37 : vector<256x128xf32>
      %c0_21 = arith.constant 0 : index
      %c0_22 = arith.constant 0 : index
      %39 = vector.load %arg7[%c0_21, %c0_22] : memref<256x128xf32, #tpu.memory_space<vmem>>, vector<256x128xf32>
      tpu.vector_store %arg7[%c0_21, %c0_22], %38 {strides = array<i32>} : memref<256x128xf32, #tpu.memory_space<vmem>>, vector<256x128xf32>,
    } else {
    }
    return
  }
  func.func @transform_0(%arg0: i32, %arg1: i32) -> (i32, i32, i32) {
    %c0_i32 = arith.constant 0 : i32
    %c0_i32_0 = arith.constant 0 : i32
    return %arg1, %c0_i32, %arg0 : i32, i32, i32
  }
  func.func @transform_1(%arg0: i32, %arg1: i32) -> (i32, i32) {
    %c0_i32 = arith.constant 0 : i32
    %c0_i32_0 = arith.constant 0 : i32
    %c0_i32_1 = arith.constant 0 : i32
    return %c0_i32, %c0_i32_0 : i32, i32
  }
  func.func @transform_2(%arg0: i32, %arg1: i32) -> (i32, i32) {
    %c0_i32 = arith.constant 0 : i32
    %c0_i32_0 = arith.constant 0 : i32
    %c0_i32_1 = arith.constant 0 : i32
    return %c0_i32, %c0_i32_0 : i32, i32
  }
  func.func @transform_3(%arg0: i32, %arg1: i32) -> (i32, i32) {
    %c0_i32 = arith.constant 0 : i32
    %c0_i32_0 = arith.constant 0 : i32
    %c0_i32_1 = arith.constant 0 : i32
    return %c0_i32, %c0_i32_0 : i32, i32
  }
  func.func @transform_4(%arg0: i32, %arg1: i32) -> (i32, i32) {
    %c0_i32 = arith.constant 0 : i32
    %c0_i32_0 = arith.constant 0 : i32
    %c0_i32_1 = arith.constant 0 : i32
    return %c0_i32, %c0_i32_0 : i32, i32
  }
  func.func @transform_5(%arg0: i32, %arg1: i32) -> (i32, i32) {
    %c0_i32 = arith.constant 0 : i32
    %c0_i32_0 = arith.constant 0 : i32
    return %c0_i32, %arg0 : i32, i32
  }
}

</mosaic_0001>

<llo_original>
// kernel: tpu_custom_call.1
$region0: #{tpu_custom_call.1}
  #allocation0 [shape = 'u32[]', space=smem, size = 0x4, offset = 0x4, fixed_abs, tag = 'smem constant byte address 0x4 - core index']
  #allocation1 [shape = 'u32[144,128]{1,0:T(1,128)}', space=vmem, size = 0x12000, scoped, tag = 'internal scratch']
  %s0 = inlined_call_operand.vmem [shape: f32[20,2,128], index: 0, kind: input, shape index: {}]
  %s1 = inlined_call_operand.vmem [shape: f32[64,2], index: 1, kind: input, shape index: {}]
  %s2 = inlined_call_operand.vmem [shape: f32[64,1], index: 2, kind: input, shape index: {}]
  %s3 = inlined_call_operand.vmem [shape: bf16[256,64], index: 3, kind: input, shape index: {}]
  %s4 = inlined_call_operand.vmem [shape: f32[256,1], index: 4, kind: input, shape index: {}]
  %s5 = inlined_call_operand.hbm [shape: f32[256,128], index: 5, kind: output, shape index: {}]
  %s6 = sld [smem:[#allocation0]]
  $region49: #{tpu_custom_call.1} parent=0
    _
  %s8 = ssub.s32 1, %s6
  %s9 = scalar_select 0, %s8, %s6
  $region1: #{tpu_custom_call.1} parent=0
    #allocation2 [shape = 'u8[131072]{0}', space=vmem, size = 0x20000, scoped, tag = 'output window, operand 0, single buffered']
    #allocation3 [shape = 's32[1]{0}', space=sflag, size = 0x4, scoped, tag = 'scoped memory for tpu_custom_call.1']
    %10 = vsyncpa [#allocation3], 0
    // Predicated region
    $region2: #{tpu_custom_call.1} parent=1 // pred_check
      _
    $region3: #{tpu_custom_call.1} parent=1 // pred_check_branch
      %12 = sbr.rel (0) target = $region5
    $region4: #{tpu_custom_call.1} parent=1 // pred_region
      _
    $region5: #{tpu_custom_call.1} parent=1 // pred_fallthru
      _
    // Predicated region
    $region6: #{tpu_custom_call.1} parent=1 // pred_check
      _
    $region7: #{tpu_custom_call.1} parent=1 // pred_check_branch
      %14 = sbr.rel (0) target = $region9
    $region8: #{tpu_custom_call.1} parent=1 // pred_region
      _
    $region9: #{tpu_custom_call.1} parent=1 // pred_fallthru
      _
    // Predicated region
    $region10: #{tpu_custom_call.1} parent=1 // pred_check
      _
    $region11: #{tpu_custom_call.1} parent=1 // pred_check_branch
      %16 = sbr.rel (0) target = $region13
    $region12: #{tpu_custom_call.1} parent=1 // pred_region
      _
    $region13: #{tpu_custom_call.1} parent=1 // pred_fallthru
      _
    // Predicated region
    $region14: #{tpu_custom_call.1} parent=1 // pred_check
      _
    $region15: #{tpu_custom_call.1} parent=1 // pred_check_branch
      %18 = sbr.rel (0) target = $region17
    $region16: #{tpu_custom_call.1} parent=1 // pred_region
      _
    $region17: #{tpu_custom_call.1} parent=1 // pred_fallthru
      _
    // Predicated region
    $region18: #{tpu_custom_call.1} parent=1 // pred_check
      _
    $region19: #{tpu_custom_call.1} parent=1 // pred_check_branch
      %20 = sbr.rel (0) target = $region21
    $region20: #{tpu_custom_call.1} parent=1 // pred_region
      _
    $region21: #{tpu_custom_call.1} parent=1 // pred_fallthru
      _
    %v22 = vld [vmem:[%s1] sm:$0xff]
    %v23 = vld [vmem:[%s1 + $0x8] sm:$0xff]
    %v24 = vld [vmem:[%s1 + $0x10] sm:$0xff]
    %v25 = vld [vmem:[%s1 + $0x18] sm:$0xff]
    %v26 = vld [vmem:[%s1 + $0x20] sm:$0xff]
    %v27 = vld [vmem:[%s1 + $0x28] sm:$0xff]
    %v28 = vld [vmem:[%s1 + $0x30] sm:$0xff]
    %v29 = vld [vmem:[%s1 + $0x38] sm:$0xff]
    %31 = vset.pattern.permute.xlu0 0
    %32 = vperm.xlu0 %31, %v22
    %v33 = vpop.permute.xlu0 %32
    %36 = vset.pattern.permute.xlu0 0
    %37 = vperm.xlu0 %36, %v23
    %v38 = vpop.permute.xlu0 %37
    %41 = vset.pattern.permute.xlu0 0
    %42 = vperm.xlu0 %41, %v24
    %v43 = vpop.permute.xlu0 %42
    %46 = vset.pattern.permute.xlu0 0
    %47 = vperm.xlu0 %46, %v25
    %v48 = vpop.permute.xlu0 %47
    %51 = vset.pattern.permute.xlu0 0
    %52 = vperm.xlu0 %51, %v26
    %v53 = vpop.permute.xlu0 %52
    %56 = vset.pattern.permute.xlu0 0
    %57 = vperm.xlu0 %56, %v27
    %v58 = vpop.permute.xlu0 %57
    %61 = vset.pattern.permute.xlu0 0
    %62 = vperm.xlu0 %61, %v28
    %v63 = vpop.permute.xlu0 %62
    %66 = vset.pattern.permute.xlu0 0
    %67 = vperm.xlu0 %66, %v29
    %v68 = vpop.permute.xlu0 %67
    %70 = vset.pattern.permute.xlu0 1
    %71 = vperm.xlu0 %70, %v22
    %v72 = vpop.permute.xlu0 %71
    %74 = vset.pattern.permute.xlu0 1
    %75 = vperm.xlu0 %74, %v23
    %v76 = vpop.permute.xlu0 %75
    %78 = vset.pattern.permute.xlu0 1
    %79 = vperm.xlu0 %78, %v24
    %v80 = vpop.permute.xlu0 %79
    %82 = vset.pattern.permute.xlu0 1
    %83 = vperm.xlu0 %82, %v25
    %v84 = vpop.permute.xlu0 %83
    %86 = vset.pattern.permute.xlu0 1
    %87 = vperm.xlu0 %86, %v26
    %v88 = vpop.permute.xlu0 %87
    %90 = vset.pattern.permute.xlu0 1
    %91 = vperm.xlu0 %90, %v27
    %v92 = vpop.permute.xlu0 %91
    %94 = vset.pattern.permute.xlu0 1
    %95 = vperm.xlu0 %94, %v28
    %v96 = vpop.permute.xlu0 %95
    %98 = vset.pattern.permute.xlu0 1
    %99 = vperm.xlu0 %98, %v29
    %v100 = vpop.permute.xlu0 %99
    %v102 = vld [vmem:[%s2] sm:$0xff]
    %v103 = vld [vmem:[%s2 + $0x8] sm:$0xff]
    %v104 = vld [vmem:[%s2 + $0x10] sm:$0xff]
    %v105 = vld [vmem:[%s2 + $0x18] sm:$0xff]
    %v106 = vld [vmem:[%s2 + $0x20] sm:$0xff]
    %v107 = vld [vmem:[%s2 + $0x28] sm:$0xff]
    %v108 = vld [vmem:[%s2 + $0x30] sm:$0xff]
    %v109 = vld [vmem:[%s2 + $0x38] sm:$0xff]
    %111 = vset.pattern.permute.xlu0 0
    %112 = vperm.xlu0 %111, %v102
    %v113 = vpop.permute.xlu0 %112
    %116 = vset.pattern.permute.xlu0 0
    %117 = vperm.xlu0 %116, %v103
    %v118 = vpop.permute.xlu0 %117
    %121 = vset.pattern.permute.xlu0 0
    %122 = vperm.xlu0 %121, %v104
    %v123 = vpop.permute.xlu0 %122
    %126 = vset.pattern.permute.xlu0 0
    %127 = vperm.xlu0 %126, %v105
    %v128 = vpop.permute.xlu0 %127
    %131 = vset.pattern.permute.xlu0 0
    %132 = vperm.xlu0 %131, %v106
    %v133 = vpop.permute.xlu0 %132
    %136 = vset.pattern.permute.xlu0 0
    %137 = vperm.xlu0 %136, %v107
    %v138 = vpop.permute.xlu0 %137
    %141 = vset.pattern.permute.xlu0 0
    %142 = vperm.xlu0 %141, %v108
    %v143 = vpop.permute.xlu0 %142
    %146 = vset.pattern.permute.xlu0 0
    %147 = vperm.xlu0 %146, %v109
    %v148 = vpop.permute.xlu0 %147
    %v150 = vld [vmem:[%s3] sm:$0xf]
    %v151 = vld [vmem:[%s3 + $0x4] sm:$0xf]
    %v152 = vld [vmem:[%s3 + $0x8] sm:$0xf]
    %v153 = vld [vmem:[%s3 + $0xc] sm:$0xf]
    %v154 = vld [vmem:[%s3 + $0x10] sm:$0xf]
    %v155 = vld [vmem:[%s3 + $0x14] sm:$0xf]
    %v156 = vld [vmem:[%s3 + $0x18] sm:$0xf]
    %v157 = vld [vmem:[%s3 + $0x1c] sm:$0xf]
    %v158 = vld [vmem:[%s3 + $0x20] sm:$0xf]
    %v159 = vld [vmem:[%s3 + $0x24] sm:$0xf]
    %v160 = vld [vmem:[%s3 + $0x28] sm:$0xf]
    %v161 = vld [vmem:[%s3 + $0x2c] sm:$0xf]
    %v162 = vld [vmem:[%s3 + $0x30] sm:$0xf]
    %v163 = vld [vmem:[%s3 + $0x34] sm:$0xf]
    %v164 = vld [vmem:[%s3 + $0x38] sm:$0xf]
    %v165 = vld [vmem:[%s3 + $0x3c] sm:$0xf]
    %v166 = vld [vmem:[%s3 + $0x40] sm:$0xf]
    %v167 = vld [vmem:[%s3 + $0x44] sm:$0xf]
    %v168 = vld [vmem:[%s3 + $0x48] sm:$0xf]
    %v169 = vld [vmem:[%s3 + $0x4c] sm:$0xf]
    %v170 = vld [vmem:[%s3 + $0x50] sm:$0xf]
    %v171 = vld [vmem:[%s3 + $0x54] sm:$0xf]
    %v172 = vld [vmem:[%s3 + $0x58] sm:$0xf]
    %v173 = vld [vmem:[%s3 + $0x5c] sm:$0xf]
    %v174 = vld [vmem:[%s3 + $0x60] sm:$0xf]
    %v175 = vld [vmem:[%s3 + $0x64] sm:$0xf]
    %v176 = vld [vmem:[%s3 + $0x68] sm:$0xf]
    %v177 = vld [vmem:[%s3 + $0x6c] sm:$0xf]
    %v178 = vld [vmem:[%s3 + $0x70] sm:$0xf]
    %v179 = vld [vmem:[%s3 + $0x74] sm:$0xf]
    %v180 = vld [vmem:[%s3 + $0x78] sm:$0xf]
    %v181 = vld [vmem:[%s3 + $0x7c] sm:$0xf]
    %v182 = vld [vmem:[%s0] sm:$0x3]
    %v183 = vlaneseq
    %v184 = vshrl.u32 %v183, 7
    %v185 = vsub.s32 0, %v184
    %v186 = vrot.slane %v182, %v185
    %v187 = vmul.f32 %v186, %v33
    %v188 = vmul.f32 %v186, %v38
    %v189 = vmul.f32 %v186, %v43
    %v190 = vmul.f32 %v186, %v48
    %v191 = vmul.f32 %v186, %v53
    %v192 = vmul.f32 %v186, %v58
    %v193 = vmul.f32 %v186, %v63
    %v194 = vmul.f32 %v186, %v68
    %v195 = vlaneseq
    %v196 = vshrl.u32 %v195, 7
    %v197 = vsub.s32 1, %v196
    %v198 = vrot.slane %v182, %v197
    %v199 = vmul.f32 %v198, %v72
    %v200 = vmul.f32 %v198, %v76
    %v201 = vmul.f32 %v198, %v80
    %v202 = vmul.f32 %v198, %v84
    %v203 = vmul.f32 %v198, %v88
    %v204 = vmul.f32 %v198, %v92
    %v205 = vmul.f32 %v198, %v96
    %v206 = vmul.f32 %v198, %v100
    %v207 = vadd.f32 %v187, %v199
    %v208 = vadd.f32 %v188, %v200
    %v209 = vadd.f32 %v189, %v201
    %v210 = vadd.f32 %v190, %v202
    %v211 = vadd.f32 %v191, %v203
    %v212 = vadd.f32 %v192, %v204
    %v213 = vadd.f32 %v193, %v205
    %v214 = vadd.f32 %v194, %v206
    %v215 = vadd.f32 %v207, %v113
    %v216 = vadd.f32 %v208, %v118
    %v217 = vadd.f32 %v209, %v123
    %v218 = vadd.f32 %v210, %v128
    %v219 = vadd.f32 %v211, %v133
    %v220 = vadd.f32 %v212, %v138
    %v221 = vadd.f32 %v213, %v143
    %v222 = vadd.f32 %v214, %v148
    %v223 = vmax.f32 %v215, 0.0
    %v224 = vmax.f32 %v216, 0.0
    %v225 = vmax.f32 %v217, 0.0
    %v226 = vmax.f32 %v218, 0.0
    %v227 = vmax.f32 %v219, 0.0
    %v228 = vmax.f32 %v220, 0.0
    %v229 = vmax.f32 %v221, 0.0
    %v230 = vmax.f32 %v222, 0.0
    %v231 = vpack.c.bf16 %v224, %v223
    %v232 = vpack.c.bf16 %v226, %v225
    %v233 = vpack.c.bf16 %v228, %v227
    %v234 = vpack.c.bf16 %v230, %v229
    %v267 = vunpack.c.l.b16 %v150
    %v268 = vunpack.c.l.b16 %v151
    %v269 = vunpack.c.l.b16 %v152
    %v270 = vunpack.c.l.b16 %v153
    %v271 = vunpack.c.l.b16 %v154
    %v272 = vunpack.c.l.b16 %v155
    %v273 = vunpack.c.l.b16 %v156
    %v274 = vunpack.c.l.b16 %v157
    %v275 = vunpack.c.l.b16 %v158
    %v276 = vunpack.c.l.b16 %v159
    %v277 = vunpack.c.l.b16 %v160
    %v278 = vunpack.c.l.b16 %v161
    %v279 = vunpack.c.l.b16 %v162
    %v280 = vunpack.c.l.b16 %v163
    %v281 = vunpack.c.l.b16 %v164
    %v282 = vunpack.c.l.b16 %v165
    %v283 = vunpack.c.l.b16 %v166
    %v284 = vunpack.c.l.b16 %v167
    %v285 = vunpack.c.l.b16 %v168
    %v286 = vunpack.c.l.b16 %v169
    %v287 = vunpack.c.l.b16 %v170
    %v288 = vunpack.c.l.b16 %v171
    %v289 = vunpack.c.l.b16 %v172
    %v290 = vunpack.c.l.b16 %v173
    %v291 = vunpack.c.l.b16 %v174
    %v292 = vunpack.c.l.b16 %v175
    %v293 = vunpack.c.l.b16 %v176
    %v294 = vunpack.c.l.b16 %v177
    %v295 = vunpack.c.l.b16 %v178
    %v296 = vunpack.c.l.b16 %v179
    %v297 = vunpack.c.l.b16 %v180
    %v298 = vunpack.c.l.b16 %v181
    %v299 = vpack.c.b16 %v268, %v267
    %v300 = vpack.c.b16 %v270, %v269
    %v301 = vpack.c.b16 %v272, %v271
    %v302 = vpack.c.b16 %v274, %v273
    %v303 = vpack.c.b16 %v276, %v275
    %v304 = vpack.c.b16 %v278, %v277
    %v305 = vpack.c.b16 %v280, %v279
    %v306 = vpack.c.b16 %v282, %v281
    %v307 = vpack.c.b16 %v284, %v283
    %v308 = vpack.c.b16 %v286, %v285
    %v309 = vpack.c.b16 %v288, %v287
    %v310 = vpack.c.b16 %v290, %v289
    %v311 = vpack.c.b16 %v292, %v291
    %v312 = vpack.c.b16 %v294, %v293
    %v313 = vpack.c.b16 %v296, %v295
    %v314 = vpack.c.b16 %v298, %v297
    %vm315 = vcmask 523264
    %v317 = vsel %vm315, %v299, 0
    %v320 = vsel %vm315, %v300, 0
    %v323 = vsel %vm315, %v301, 0
    %v326 = vsel %vm315, %v302, 0
    %v329 = vsel %vm315, %v303, 0
    %v332 = vsel %vm315, %v304, 0
    %v335 = vsel %vm315, %v305, 0
    %v338 = vsel %vm315, %v306, 0
    %v341 = vsel %vm315, %v307, 0
    %v344 = vsel %vm315, %v308, 0
    %v347 = vsel %vm315, %v309, 0
    %v350 = vsel %vm315, %v310, 0
    %v353 = vsel %vm315, %v311, 0
    %v356 = vsel %vm315, %v312, 0
    %v359 = vsel %vm315, %v313, 0
    %v362 = vsel %vm315, %v314, 0
    %364 = vmatprep.subr.bf16.mxu0 0
    %365 = vmatpush1.bf16.msra.mxu0 0
    %366 = vmatprep.subr.bf16.mxu0 0
    %367 = vmatpush1.bf16.msra.mxu0 0
    %368 = vmatprep.subr.bf16.mxu0 0
    %369 = vmatpush1.bf16.msra.mxu0 0
    %370 = vmatprep.subr.bf16.mxu0 0
    %371 = vmatpush1.bf16.msra.mxu0 0
    %372 = vmatprep.subr.bf16.mxu0 0
    %373 = vmatpush1.bf16.msra.mxu0 %v234
    %374 = vmatprep.subr.bf16.mxu0 0
    %375 = vmatpush1.bf16.msra.mxu0 %v233
    %376 = vmatprep.subr.bf16.mxu0 0
    %377 = vmatpush1.bf16.msra.mxu0 %v232
    %378 = vmatprep.subr.bf16.mxu0 0
    %379 = vmatpush1.bf16.msra.mxu0 %v231
    %380 = vmatprep.subr.bf16.mxu0 0
    %381 = vmatpush2.bf16.msra.mxu0 0
    %382 = vmatprep.subr.bf16.mxu0 0
    %383 = vmatpush2.bf16.msra.mxu0 0
    %384 = vmatprep.subr.bf16.mxu0 0
    %385 = vmatpush2.bf16.msra.mxu0 0
    %386 = vmatprep.subr.bf16.mxu0 0
    %387 = vmatpush2.bf16.msra.mxu0 0
    %388 = vmatprep.subr.bf16.mxu0 0
    %389 = vmatpush2.bf16.msra.mxu0 0
    %390 = vmatprep.subr.bf16.mxu0 0
    %391 = vmatpush2.bf16.msra.mxu0 0
    %392 = vmatprep.subr.bf16.mxu0 0
    %393 = vmatpush2.bf16.msra.mxu0 0
    %394 = vmatprep.subr.bf16.mxu0 0
    %395 = vmatpush2.bf16.msra.mxu0 0
    %396 = vmatprep.mubr.bf16.mxu0 0
    %397 = vmatmul.mubr.bf16.gmra.mxu0 %v317
    %v398 = vpop.f32.mrf.mxu0
    %v399 = vadd.f32 0.0, %v398
    %v400 = vpop.f32.mrf.mxu0
    %v401 = vpop.f32.mrf.mxu0
    %v402 = vadd.f32 0.0, %v401
    %v403 = vpop.f32.mrf.mxu0
    %404 = vmatprep.mubr.bf16.mxu0 0
    %405 = vmatmul.mubr.bf16.gmra.mxu0 %v320
    %v406 = vpop.f32.mrf.mxu0
    %v407 = vadd.f32 0.0, %v406
    %v408 = vpop.f32.mrf.mxu0
    %v409 = vpop.f32.mrf.mxu0
    %v410 = vadd.f32 0.0, %v409
    %v411 = vpop.f32.mrf.mxu0
    %412 = vmatprep.mubr.bf16.mxu0 0
    %413 = vmatmul.mubr.bf16.gmra.mxu0 %v323
    %v414 = vpop.f32.mrf.mxu0
    %v415 = vadd.f32 0.0, %v414
    %v416 = vpop.f32.mrf.mxu0
    %v417 = vpop.f32.mrf.mxu0
    %v418 = vadd.f32 0.0, %v417
    %v419 = vpop.f32.mrf.mxu0
    %420 = vmatprep.mubr.bf16.mxu0 0
    %421 = vmatmul.mubr.bf16.gmra.mxu0 %v326
    %v422 = vpop.f32.mrf.mxu0
    %v423 = vadd.f32 0.0, %v422
    %v424 = vpop.f32.mrf.mxu0
    %v425 = vpop.f32.mrf.mxu0
    %v426 = vadd.f32 0.0, %v425
    %v427 = vpop.f32.mrf.mxu0
    %428 = vmatprep.mubr.bf16.mxu0 0
    %429 = vmatmul.mubr.bf16.gmra.mxu0 %v329
    %v430 = vpop.f32.mrf.mxu0
    %v431 = vadd.f32 0.0, %v430
    %v432 = vpop.f32.mrf.mxu0
    %v433 = vpop.f32.mrf.mxu0
    %v434 = vadd.f32 0.0, %v433
    %v435 = vpop.f32.mrf.mxu0
    %436 = vmatprep.mubr.bf16.mxu0 0
    %437 = vmatmul.mubr.bf16.gmra.mxu0 %v332
    %v438 = vpop.f32.mrf.mxu0
    %v439 = vadd.f32 0.0, %v438
    %v440 = vpop.f32.mrf.mxu0
    %v441 = vpop.f32.mrf.mxu0
    %v442 = vadd.f32 0.0, %v441
    %v443 = vpop.f32.mrf.mxu0
    %444 = vmatprep.mubr.bf16.mxu0 0
    %445 = vmatmul.mubr.bf16.gmra.mxu0 %v335
    %v446 = vpop.f32.mrf.mxu0
    %v447 = vadd.f32 0.0, %v446
    %v448 = vpop.f32.mrf.mxu0
    %v449 = vpop.f32.mrf.mxu0
    %v450 = vadd.f32 0.0, %v449
    %v451 = vpop.f32.mrf.mxu0
    %452 = vmatprep.mubr.bf16.mxu0 0
    %453 = vmatmul.mubr.bf16.gmra.mxu0 %v338
    %v454 = vpop.f32.mrf.mxu0
    %v455 = vadd.f32 0.0, %v454
    %v456 = vpop.f32.mrf.mxu0
    %v457 = vpop.f32.mrf.mxu0
    %v458 = vadd.f32 0.0, %v457
    %v459 = vpop.f32.mrf.mxu0
    %460 = vmatprep.mubr.bf16.mxu0 0
    %461 = vmatmul.mubr.bf16.gmra.mxu0 %v341
    %v462 = vpop.f32.mrf.mxu0
    %v463 = vadd.f32 0.0, %v462
    %v464 = vpop.f32.mrf.mxu0
    %v465 = vpop.f32.mrf.mxu0
    %v466 = vadd.f32 0.0, %v465
    %v467 = vpop.f32.mrf.mxu0
    %468 = vmatprep.mubr.bf16.mxu0 0
    %469 = vmatmul.mubr.bf16.gmra.mxu0 %v344
    %v470 = vpop.f32.mrf.mxu0
    %v471 = vadd.f32 0.0, %v470
    %v472 = vpop.f32.mrf.mxu0
    %v473 = vpop.f32.mrf.mxu0
    %v474 = vadd.f32 0.0, %v473
    %v475 = vpop.f32.mrf.mxu0
    %476 = vmatprep.mubr.bf16.mxu0 0
    %477 = vmatmul.mubr.bf16.gmra.mxu0 %v347
    %v478 = vpop.f32.mrf.mxu0
    %v479 = vadd.f32 0.0, %v478
    %v480 = vpop.f32.mrf.mxu0
    %v481 = vpop.f32.mrf.mxu0
    %v482 = vadd.f32 0.0, %v481
    %v483 = vpop.f32.mrf.mxu0
    %484 = vmatprep.mubr.bf16.mxu0 0
    %485 = vmatmul.mubr.bf16.gmra.mxu0 %v350
    %v486 = vpop.f32.mrf.mxu0
    %v487 = vadd.f32 0.0, %v486
    %v488 = vpop.f32.mrf.mxu0
    %v489 = vpop.f32.mrf.mxu0
    %v490 = vadd.f32 0.0, %v489
    %v491 = vpop.f32.mrf.mxu0
    %492 = vmatprep.mubr.bf16.mxu0 0
    %493 = vmatmul.mubr.bf16.gmra.mxu0 %v353
    %v494 = vpop.f32.mrf.mxu0
    %v495 = vadd.f32 0.0, %v494
    %v496 = vpop.f32.mrf.mxu0
    %v497 = vpop.f32.mrf.mxu0
    %v498 = vadd.f32 0.0, %v497
    %v499 = vpop.f32.mrf.mxu0
    %500 = vmatprep.mubr.bf16.mxu0 0
    %501 = vmatmul.mubr.bf16.gmra.mxu0 %v356
    %v502 = vpop.f32.mrf.mxu0
    %v503 = vadd.f32 0.0, %v502
    %v504 = vpop.f32.mrf.mxu0
    %v505 = vpop.f32.mrf.mxu0
    %v506 = vadd.f32 0.0, %v505
    %v507 = vpop.f32.mrf.mxu0
    %508 = vmatprep.mubr.bf16.mxu0 0
    %509 = vmatmul.mubr.bf16.gmra.mxu0 %v359
    %v510 = vpop.f32.mrf.mxu0
    %v511 = vadd.f32 0.0, %v510
    %v512 = vpop.f32.mrf.mxu0
    %v513 = vpop.f32.mrf.mxu0
    %v514 = vadd.f32 0.0, %v513
    %v515 = vpop.f32.mrf.mxu0
    %516 = vmatprep.mubr.bf16.mxu0 0
    %517 = vmatmul.mubr.bf16.gmra.mxu0 %v362
    %v518 = vpop.f32.mrf.mxu0
    %v519 = vadd.f32 0.0, %v518
    %v520 = vpop.f32.mrf.mxu0
    %v521 = vpop.f32.mrf.mxu0
    %v522 = vadd.f32 0.0, %v521
    %v523 = vpop.f32.mrf.mxu0
    %524 = vdwg.mxu0
    loop: start=1, step=1, limit=20
    $region22: #{tpu_custom_call.1} parent=1 // loop_pre_header
      _
    $region23: #{tpu_custom_call.1} parent=1 // loop_header
      %s526 = sphi 1, %s530
      %p527 = scmp.ge.s32.totalorder %s526, 20
      %v531 = vphi %v399, %v779
      %v532 = vphi %v402, %v780
      %v533 = vphi %v407, %v781
      %v534 = vphi %v410, %v782
      %v535 = vphi %v415, %v783
      %v536 = vphi %v418, %v784
      %v537 = vphi %v423, %v785
      %v538 = vphi %v426, %v786
      %v539 = vphi %v431, %v787
      %v540 = vphi %v434, %v788
      %v541 = vphi %v439, %v789
      %v542 = vphi %v442, %v790
      %v543 = vphi %v447, %v791
      %v544 = vphi %v450, %v792
      %v545 = vphi %v455, %v793
      %v546 = vphi %v458, %v794
      %v547 = vphi %v463, %v795
      %v548 = vphi %v466, %v796
      %v549 = vphi %v471, %v797
      %v550 = vphi %v474, %v798
      %v551 = vphi %v479, %v799
      %v552 = vphi %v482, %v800
      %v553 = vphi %v487, %v801
      %v554 = vphi %v490, %v802
      %v555 = vphi %v495, %v803
      %v556 = vphi %v498, %v804
      %v557 = vphi %v503, %v805
      %v558 = vphi %v506, %v806
      %v559 = vphi %v511, %v807
      %v560 = vphi %v514, %v808
      %v561 = vphi %v519, %v809
      %v562 = vphi %v522, %v810
    $region24: #{tpu_custom_call.1} parent=1 // loop_header_branch
      %529 = sbr.rel (%p527) target = $region28
    $region25: #{tpu_custom_call.1} parent=1 // loop_body
      %s563 = smul.u32 %s526, 2
      %s564 = scalar_lea.vmem %s0, %s563
      %v565 = vld [vmem:[%s564] sm:$0x3]
      %v566 = vlaneseq
      %v567 = vshrl.u32 %v566, 7
      %v568 = vsub.s32 0, %v567
      %v569 = vrot.slane %v565, %v568
      %v570 = vmul.f32 %v569, %v33
      %v571 = vmul.f32 %v569, %v38
      %v572 = vmul.f32 %v569, %v43
      %v573 = vmul.f32 %v569, %v48
      %v574 = vmul.f32 %v569, %v53
      %v575 = vmul.f32 %v569, %v58
      %v576 = vmul.f32 %v569, %v63
      %v577 = vmul.f32 %v569, %v68
      %v578 = vlaneseq
      %v579 = vshrl.u32 %v578, 7
      %v580 = vsub.s32 1, %v579
      %v581 = vrot.slane %v565, %v580
      %v582 = vmul.f32 %v581, %v72
      %v583 = vmul.f32 %v581, %v76
      %v584 = vmul.f32 %v581, %v80
      %v585 = vmul.f32 %v581, %v84
      %v586 = vmul.f32 %v581, %v88
      %v587 = vmul.f32 %v581, %v92
      %v588 = vmul.f32 %v581, %v96
      %v589 = vmul.f32 %v581, %v100
      %v590 = vadd.f32 %v570, %v582
      %v591 = vadd.f32 %v571, %v583
      %v592 = vadd.f32 %v572, %v584
      %v593 = vadd.f32 %v573, %v585
      %v594 = vadd.f32 %v574, %v586
      %v595 = vadd.f32 %v575, %v587
      %v596 = vadd.f32 %v576, %v588
      %v597 = vadd.f32 %v577, %v589
      %v598 = vadd.f32 %v590, %v113
      %v599 = vadd.f32 %v591, %v118
      %v600 = vadd.f32 %v592, %v123
      %v601 = vadd.f32 %v593, %v128
      %v602 = vadd.f32 %v594, %v133
      %v603 = vadd.f32 %v595, %v138
      %v604 = vadd.f32 %v596, %v143
      %v605 = vadd.f32 %v597, %v148
      %v606 = vmax.f32 %v598, 0.0
      %v607 = vmax.f32 %v599, 0.0
      %v608 = vmax.f32 %v600, 0.0
      %v609 = vmax.f32 %v601, 0.0
      %v610 = vmax.f32 %v602, 0.0
      %v611 = vmax.f32 %v603, 0.0
      %v612 = vmax.f32 %v604, 0.0
      %v613 = vmax.f32 %v605, 0.0
      %v614 = vpack.c.bf16 %v607, %v606
      %v615 = vpack.c.bf16 %v609, %v608
      %v616 = vpack.c.bf16 %v611, %v610
      %v617 = vpack.c.bf16 %v613, %v612
      %618 = vmatprep.subr.bf16.mxu0 0
      %619 = vmatpush1.bf16.msra.mxu0 0
      %620 = vmatprep.subr.bf16.mxu0 0
      %621 = vmatpush1.bf16.msra.mxu0 0
      %622 = vmatprep.subr.bf16.mxu0 0
      %623 = vmatpush1.bf16.msra.mxu0 0
      %624 = vmatprep.subr.bf16.mxu0 0
      %625 = vmatpush1.bf16.msra.mxu0 0
      %626 = vmatprep.subr.bf16.mxu0 0
      %627 = vmatpush1.bf16.msra.mxu0 %v617
      %628 = vmatprep.subr.bf16.mxu0 0
      %629 = vmatpush1.bf16.msra.mxu0 %v616
      %630 = vmatprep.subr.bf16.mxu0 0
      %631 = vmatpush1.bf16.msra.mxu0 %v615
      %632 = vmatprep.subr.bf16.mxu0 0
      %633 = vmatpush1.bf16.msra.mxu0 %v614
      %634 = vmatprep.subr.bf16.mxu0 0
      %635 = vmatpush2.bf16.msra.mxu0 0
      %636 = vmatprep.subr.bf16.mxu0 0
      %637 = vmatpush2.bf16.msra.mxu0 0
      %638 = vmatprep.subr.bf16.mxu0 0
      %639 = vmatpush2.bf16.msra.mxu0 0
      %640 = vmatprep.subr.bf16.mxu0 0
      %641 = vmatpush2.bf16.msra.mxu0 0
      %642 = vmatprep.subr.bf16.mxu0 0
      %643 = vmatpush2.bf16.msra.mxu0 0
      %644 = vmatprep.subr.bf16.mxu0 0
      %645 = vmatpush2.bf16.msra.mxu0 0
      %646 = vmatprep.subr.bf16.mxu0 0
      %647 = vmatpush2.bf16.msra.mxu0 0
      %648 = vmatprep.subr.bf16.mxu0 0
      %649 = vmatpush2.bf16.msra.mxu0 0
      %650 = vmatprep.mubr.bf16.mxu0 0
      %651 = vmatmul.mubr.bf16.gmra.mxu0 %v317
      %v652 = vpop.f32.mrf.mxu0
      %v653 = vadd.f32 0.0, %v652
      %v654 = vpop.f32.mrf.mxu0
      %v655 = vpop.f32.mrf.mxu0
      %v656 = vadd.f32 0.0, %v655
      %v657 = vpop.f32.mrf.mxu0
      %658 = vmatprep.mubr.bf16.mxu0 0
      %659 = vmatmul.mubr.bf16.gmra.mxu0 %v320
      %v660 = vpop.f32.mrf.mxu0
      %v661 = vadd.f32 0.0, %v660
      %v662 = vpop.f32.mrf.mxu0
      %v663 = vpop.f32.mrf.mxu0
      %v664 = vadd.f32 0.0, %v663
      %v665 = vpop.f32.mrf.mxu0
      %666 = vmatprep.mubr.bf16.mxu0 0
      %667 = vmatmul.mubr.bf16.gmra.mxu0 %v323
      %v668 = vpop.f32.mrf.mxu0
      %v669 = vadd.f32 0.0, %v668
      %v670 = vpop.f32.mrf.mxu0
      %v671 = vpop.f32.mrf.mxu0
      %v672 = vadd.f32 0.0, %v671
      %v673 = vpop.f32.mrf.mxu0
      %674 = vmatprep.mubr.bf16.mxu0 0
      %675 = vmatmul.mubr.bf16.gmra.mxu0 %v326
      %v676 = vpop.f32.mrf.mxu0
      %v677 = vadd.f32 0.0, %v676
      %v678 = vpop.f32.mrf.mxu0
      %v679 = vpop.f32.mrf.mxu0
      %v680 = vadd.f32 0.0, %v679
      %v681 = vpop.f32.mrf.mxu0
      %682 = vmatprep.mubr.bf16.mxu0 0
      %683 = vmatmul.mubr.bf16.gmra.mxu0 %v329
      %v684 = vpop.f32.mrf.mxu0
      %v685 = vadd.f32 0.0, %v684
      %v686 = vpop.f32.mrf.mxu0
      %v687 = vpop.f32.mrf.mxu0
      %v688 = vadd.f32 0.0, %v687
      %v689 = vpop.f32.mrf.mxu0
      %690 = vmatprep.mubr.bf16.mxu0 0
      %691 = vmatmul.mubr.bf16.gmra.mxu0 %v332
      %v692 = vpop.f32.mrf.mxu0
      %v693 = vadd.f32 0.0, %v692
      %v694 = vpop.f32.mrf.mxu0
      %v695 = vpop.f32.mrf.mxu0
      %v696 = vadd.f32 0.0, %v695
      %v697 = vpop.f32.mrf.mxu0
      %698 = vmatprep.mubr.bf16.mxu0 0
      %699 = vmatmul.mubr.bf16.gmra.mxu0 %v335
      %v700 = vpop.f32.mrf.mxu0
      %v701 = vadd.f32 0.0, %v700
      %v702 = vpop.f32.mrf.mxu0
      %v703 = vpop.f32.mrf.mxu0
      %v704 = vadd.f32 0.0, %v703
      %v705 = vpop.f32.mrf.mxu0
      %706 = vmatprep.mubr.bf16.mxu0 0
      %707 = vmatmul.mubr.bf16.gmra.mxu0 %v338
      %v708 = vpop.f32.mrf.mxu0
      %v709 = vadd.f32 0.0, %v708
      %v710 = vpop.f32.mrf.mxu0
      %v711 = vpop.f32.mrf.mxu0
      %v712 = vadd.f32 0.0, %v711
      %v713 = vpop.f32.mrf.mxu0
      %714 = vmatprep.mubr.bf16.mxu0 0
      %715 = vmatmul.mubr.bf16.gmra.mxu0 %v341
      %v716 = vpop.f32.mrf.mxu0
      %v717 = vadd.f32 0.0, %v716
      %v718 = vpop.f32.mrf.mxu0
      %v719 = vpop.f32.mrf.mxu0
      %v720 = vadd.f32 0.0, %v719
      %v721 = vpop.f32.mrf.mxu0
      %722 = vmatprep.mubr.bf16.mxu0 0
      %723 = vmatmul.mubr.bf16.gmra.mxu0 %v344
      %v724 = vpop.f32.mrf.mxu0
      %v725 = vadd.f32 0.0, %v724
      %v726 = vpop.f32.mrf.mxu0
      %v727 = vpop.f32.mrf.mxu0
      %v728 = vadd.f32 0.0, %v727
      %v729 = vpop.f32.mrf.mxu0
      %730 = vmatprep.mubr.bf16.mxu0 0
      %731 = vmatmul.mubr.bf16.gmra.mxu0 %v347
      %v732 = vpop.f32.mrf.mxu0
      %v733 = vadd.f32 0.0, %v732
      %v734 = vpop.f32.mrf.mxu0
      %v735 = vpop.f32.mrf.mxu0
      %v736 = vadd.f32 0.0, %v735
      %v737 = vpop.f32.mrf.mxu0
      %738 = vmatprep.mubr.bf16.mxu0 0
      %739 = vmatmul.mubr.bf16.gmra.mxu0 %v350
      %v740 = vpop.f32.mrf.mxu0
      %v741 = vadd.f32 0.0, %v740
      %v742 = vpop.f32.mrf.mxu0
      %v743 = vpop.f32.mrf.mxu0
      %v744 = vadd.f32 0.0, %v743
      %v745 = vpop.f32.mrf.mxu0
      %746 = vmatprep.mubr.bf16.mxu0 0
      %747 = vmatmul.mubr.bf16.gmra.mxu0 %v353
      %v748 = vpop.f32.mrf.mxu0
      %v749 = vadd.f32 0.0, %v748
      %v750 = vpop.f32.mrf.mxu0
      %v751 = vpop.f32.mrf.mxu0
      %v752 = vadd.f32 0.0, %v751
      %v753 = vpop.f32.mrf.mxu0
      %754 = vmatprep.mubr.bf16.mxu0 0
      %755 = vmatmul.mubr.bf16.gmra.mxu0 %v356
      %v756 = vpop.f32.mrf.mxu0
      %v757 = vadd.f32 0.0, %v756
      %v758 = vpop.f32.mrf.mxu0
      %v759 = vpop.f32.mrf.mxu0
      %v760 = vadd.f32 0.0, %v759
      %v761 = vpop.f32.mrf.mxu0
      %762 = vmatprep.mubr.bf16.mxu0 0
      %763 = vmatmul.mubr.bf16.gmra.mxu0 %v359
      %v764 = vpop.f32.mrf.mxu0
      %v765 = vadd.f32 0.0, %v764
      %v766 = vpop.f32.mrf.mxu0
      %v767 = vpop.f32.mrf.mxu0
      %v768 = vadd.f32 0.0, %v767
      %v769 = vpop.f32.mrf.mxu0
      %770 = vmatprep.mubr.bf16.mxu0 0
      %771 = vmatmul.mubr.bf16.gmra.mxu0 %v362
      %v772 = vpop.f32.mrf.mxu0
      %v773 = vadd.f32 0.0, %v772
      %v774 = vpop.f32.mrf.mxu0
      %v775 = vpop.f32.mrf.mxu0
      %v776 = vadd.f32 0.0, %v775
      %v777 = vpop.f32.mrf.mxu0
      %778 = vdwg.mxu0
      %v779 = vmax.f32 %v531, %v653
      %v780 = vmax.f32 %v532, %v656
      %v781 = vmax.f32 %v533, %v661
      %v782 = vmax.f32 %v534, %v664
      %v783 = vmax.f32 %v535, %v669
      %v784 = vmax.f32 %v536, %v672
      %v785 = vmax.f32 %v537, %v677
      %v786 = vmax.f32 %v538, %v680
      %v787 = vmax.f32 %v539, %v685
      %v788 = vmax.f32 %v540, %v688
      %v789 = vmax.f32 %v541, %v693
      %v790 = vmax.f32 %v542, %v696
      %v791 = vmax.f32 %v543, %v701
      %v792 = vmax.f32 %v544, %v704
      %v793 = vmax.f32 %v545, %v709
      %v794 = vmax.f32 %v546, %v712
      %v795 = vmax.f32 %v547, %v717
      %v796 = vmax.f32 %v548, %v720
      %v797 = vmax.f32 %v549, %v725
      %v798 = vmax.f32 %v550, %v728
      %v799 = vmax.f32 %v551, %v733
      %v800 = vmax.f32 %v552, %v736
      %v801 = vmax.f32 %v553, %v741
      %v802 = vmax.f32 %v554, %v744
      %v803 = vmax.f32 %v555, %v749
      %v804 = vmax.f32 %v556, %v752
      %v805 = vmax.f32 %v557, %v757
      %v806 = vmax.f32 %v558, %v760
      %v807 = vmax.f32 %v559, %v765
      %v808 = vmax.f32 %v560, %v768
      %v809 = vmax.f32 %v561, %v773
      %v810 = vmax.f32 %v562, %v776
    $region26: #{tpu_custom_call.1} parent=1 // loop_footer
      %s530 = sadd.s32 1, %s526
    $region27: #{tpu_custom_call.1} parent=1 // loop_footer_branch
      %525 = sbr.rel target = $region23
    $region28: #{tpu_custom_call.1} parent=1 // loop_exit
      _
    %p811 = scmp.eq.s32.totalorder 0, 0
    // Predicated region
    $region29: #{tpu_custom_call.1} parent=1 // pred_check
      %p812 = pneg %p811
    $region30: #{tpu_custom_call.1} parent=1 // pred_check_branch
      %814 = sbr.rel (%p812) target = $region32
    $region31: #{tpu_custom_call.1} parent=1 // pred_region
      %815 = vst [vmem:[#allocation2] sm:$0xff] %v531
      %816 = vst [vmem:[#allocation2 + $0x8] sm:$0xff] %v532
      %817 = vst [vmem:[#allocation2 + $0x10] sm:$0xff] %v533
      %818 = vst [vmem:[#allocation2 + $0x18] sm:$0xff] %v534
      %819 = vst [vmem:[#allocation2 + $0x20] sm:$0xff] %v535
      %820 = vst [vmem:[#allocation2 + $0x28] sm:$0xff] %v536
      %821 = vst [vmem:[#allocation2 + $0x30] sm:$0xff] %v537
      %822 = vst [vmem:[#allocation2 + $0x38] sm:$0xff] %v538
      %823 = vst [vmem:[#allocation2 + $0x40] sm:$0xff] %v539
      %824 = vst [vmem:[#allocation2 + $0x48] sm:$0xff] %v540
      %825 = vst [vmem:[#allocation2 + $0x50] sm:$0xff] %v541
      %826 = vst [vmem:[#allocation2 + $0x58] sm:$0xff] %v542
      %827 = vst [vmem:[#allocation2 + $0x60] sm:$0xff] %v543
      %828 = vst [vmem:[#allocation2 + $0x68] sm:$0xff] %v544
      %829 = vst [vmem:[#allocation2 + $0x70] sm:$0xff] %v545
      %830 = vst [vmem:[#allocation2 + $0x78] sm:$0xff] %v546
      %831 = vst [vmem:[#allocation2 + $0x80] sm:$0xff] %v547
      %832 = vst [vmem:[#allocation2 + $0x88] sm:$0xff] %v548
      %833 = vst [vmem:[#allocation2 + $0x90] sm:$0xff] %v549
      %834 = vst [vmem:[#allocation2 + $0x98] sm:$0xff] %v550
      %835 = vst [vmem:[#allocation2 + $0xa0] sm:$0xff] %v551
      %836 = vst [vmem:[#allocation2 + $0xa8] sm:$0xff] %v552
      %837 = vst [vmem:[#allocation2 + $0xb0] sm:$0xff] %v553
      %838 = vst [vmem:[#allocation2 + $0xb8] sm:$0xff] %v554
      %839 = vst [vmem:[#allocation2 + $0xc0] sm:$0xff] %v555
      %840 = vst [vmem:[#allocation2 + $0xc8] sm:$0xff] %v556
      %841 = vst [vmem:[#allocation2 + $0xd0] sm:$0xff] %v557
      %842 = vst [vmem:[#allocation2 + $0xd8] sm:$0xff] %v558
      %843 = vst [vmem:[#allocation2 + $0xe0] sm:$0xff] %v559
      %844 = vst [vmem:[#allocation2 + $0xe8] sm:$0xff] %v560
      %845 = vst [vmem:[#allocation2 + $0xf0] sm:$0xff] %v561
      %846 = vst [vmem:[#allocation2 + $0xf8] sm:$0xff] %v562
    $region32: #{tpu_custom_call.1} parent=1 // pred_fallthru
      _
    %p847 = scmp.gt.s32.totalorder 0, 0
    // Predicated region
    $region33: #{tpu_custom_call.1} parent=1 // pred_check
      %p848 = pneg %p847
    $region34: #{tpu_custom_call.1} parent=1 // pred_check_branch
      %850 = sbr.rel (%p848) target = $region36
    $region35: #{tpu_custom_call.1} parent=1 // pred_region
      %v851 = vld [vmem:[#allocation2] sm:$0xff]
      %v852 = vld [vmem:[#allocation2 + $0x8] sm:$0xff]
      %v853 = vld [vmem:[#allocation2 + $0x10] sm:$0xff]
      %v854 = vld [vmem:[#allocation2 + $0x18] sm:$0xff]
      %v855 = vld [vmem:[#allocation2 + $0x20] sm:$0xff]
      %v856 = vld [vmem:[#allocation2 + $0x28] sm:$0xff]
      %v857 = vld [vmem:[#allocation2 + $0x30] sm:$0xff]
      %v858 = vld [vmem:[#allocation2 + $0x38] sm:$0xff]
      %v859 = vld [vmem:[#allocation2 + $0x40] sm:$0xff]
      %v860 = vld [vmem:[#allocation2 + $0x48] sm:$0xff]
      %v861 = vld [vmem:[#allocation2 + $0x50] sm:$0xff]
      %v862 = vld [vmem:[#allocation2 + $0x58] sm:$0xff]
      %v863 = vld [vmem:[#allocation2 + $0x60] sm:$0xff]
      %v864 = vld [vmem:[#allocation2 + $0x68] sm:$0xff]
      %v865 = vld [vmem:[#allocation2 + $0x70] sm:$0xff]
      %v866 = vld [vmem:[#allocation2 + $0x78] sm:$0xff]
      %v867 = vld [vmem:[#allocation2 + $0x80] sm:$0xff]
      %v868 = vld [vmem:[#allocation2 + $0x88] sm:$0xff]
      %v869 = vld [vmem:[#allocation2 + $0x90] sm:$0xff]
      %v870 = vld [vmem:[#allocation2 + $0x98] sm:$0xff]
      %v871 = vld [vmem:[#allocation2 + $0xa0] sm:$0xff]
      %v872 = vld [vmem:[#allocation2 + $0xa8] sm:$0xff]
      %v873 = vld [vmem:[#allocation2 + $0xb0] sm:$0xff]
      %v874 = vld [vmem:[#allocation2 + $0xb8] sm:$0xff]
      %v875 = vld [vmem:[#allocation2 + $0xc0] sm:$0xff]
      %v876 = vld [vmem:[#allocation2 + $0xc8] sm:$0xff]
      %v877 = vld [vmem:[#allocation2 + $0xd0] sm:$0xff]
      %v878 = vld [vmem:[#allocation2 + $0xd8] sm:$0xff]
      %v879 = vld [vmem:[#allocation2 + $0xe0] sm:$0xff]
      %v880 = vld [vmem:[#allocation2 + $0xe8] sm:$0xff]
      %v881 = vld [vmem:[#allocation2 + $0xf0] sm:$0xff]
      %v882 = vld [vmem:[#allocation2 + $0xf8] sm:$0xff]
      %v883 = vmax.f32 %v851, %v531
      %v884 = vmax.f32 %v852, %v532
      %v885 = vmax.f32 %v853, %v533
      %v886 = vmax.f32 %v854, %v534
      %v887 = vmax.f32 %v855, %v535
      %v888 = vmax.f32 %v856, %v536
      %v889 = vmax.f32 %v857, %v537
      %v890 = vmax.f32 %v858, %v538
      %v891 = vmax.f32 %v859, %v539
      %v892 = vmax.f32 %v860, %v540
      %v893 = vmax.f32 %v861, %v541
      %v894 = vmax.f32 %v862, %v542
      %v895 = vmax.f32 %v863, %v543
      %v896 = vmax.f32 %v864, %v544
      %v897 = vmax.f32 %v865, %v545
      %v898 = vmax.f32 %v866, %v546
      %v899 = vmax.f32 %v867, %v547
      %v900 = vmax.f32 %v868, %v548
      %v901 = vmax.f32 %v869, %v549
      %v902 = vmax.f32 %v870, %v550
      %v903 = vmax.f32 %v871, %v551
      %v904 = vmax.f32 %v872, %v552
      %v905 = vmax.f32 %v873, %v553
      %v906 = vmax.f32 %v874, %v554
      %v907 = vmax.f32 %v875, %v555
      %v908 = vmax.f32 %v876, %v556
      %v909 = vmax.f32 %v877, %v557
      %v910 = vmax.f32 %v878, %v558
      %v911 = vmax.f32 %v879, %v559
      %v912 = vmax.f32 %v880, %v560
      %v913 = vmax.f32 %v881, %v561
      %v914 = vmax.f32 %v882, %v562
      %915 = vst [vmem:[#allocation2] sm:$0xff] %v883
      %916 = vst [vmem:[#allocation2 + $0x8] sm:$0xff] %v884
      %917 = vst [vmem:[#allocation2 + $0x10] sm:$0xff] %v885
      %918 = vst [vmem:[#allocation2 + $0x18] sm:$0xff] %v886
      %919 = vst [vmem:[#allocation2 + $0x20] sm:$0xff] %v887
      %920 = vst [vmem:[#allocation2 + $0x28] sm:$0xff] %v888
      %921 = vst [vmem:[#allocation2 + $0x30] sm:$0xff] %v889
      %922 = vst [vmem:[#allocation2 + $0x38] sm:$0xff] %v890
      %923 = vst [vmem:[#allocation2 + $0x40] sm:$0xff] %v891
      %924 = vst [vmem:[#allocation2 + $0x48] sm:$0xff] %v892
      %925 = vst [vmem:[#allocation2 + $0x50] sm:$0xff] %v893
      %926 = vst [vmem:[#allocation2 + $0x58] sm:$0xff] %v894
      %927 = vst [vmem:[#allocation2 + $0x60] sm:$0xff] %v895
      %928 = vst [vmem:[#allocation2 + $0x68] sm:$0xff] %v896
      %929 = vst [vmem:[#allocation2 + $0x70] sm:$0xff] %v897
      %930 = vst [vmem:[#allocation2 + $0x78] sm:$0xff] %v898
      %931 = vst [vmem:[#allocation2 + $0x80] sm:$0xff] %v899
      %932 = vst [vmem:[#allocation2 + $0x88] sm:$0xff] %v900
      %933 = vst [vmem:[#allocation2 + $0x90] sm:$0xff] %v901
      %934 = vst [vmem:[#allocation2 + $0x98] sm:$0xff] %v902
      %935 = vst [vmem:[#allocation2 + $0xa0] sm:$0xff] %v903
      %936 = vst [vmem:[#allocation2 + $0xa8] sm:$0xff] %v904
      %937 = vst [vmem:[#allocation2 + $0xb0] sm:$0xff] %v905
      %938 = vst [vmem:[#allocation2 + $0xb8] sm:$0xff] %v906
      %939 = vst [vmem:[#allocation2 + $0xc0] sm:$0xff] %v907
      %940 = vst [vmem:[#allocation2 + $0xc8] sm:$0xff] %v908
      %941 = vst [vmem:[#allocation2 + $0xd0] sm:$0xff] %v909
      %942 = vst [vmem:[#allocation2 + $0xd8] sm:$0xff] %v910
      %943 = vst [vmem:[#allocation2 + $0xe0] sm:$0xff] %v911
      %944 = vst [vmem:[#allocation2 + $0xe8] sm:$0xff] %v912
      %945 = vst [vmem:[#allocation2 + $0xf0] sm:$0xff] %v913
      %946 = vst [vmem:[#allocation2 + $0xf8] sm:$0xff] %v914
    $region36: #{tpu_custom_call.1} parent=1 // pred_fallthru
      _
    // Predicated region
    $region37: #{tpu_custom_call.1} parent=1 // pred_check
      %p947 = pneg %p811
    $region38: #{tpu_custom_call.1} parent=1 // pred_check_branch
      %949 = sbr.rel (%p947) target = $region40
    $region39: #{tpu_custom_call.1} parent=1 // pred_region
      %v950 = vld [vmem:[#allocation2] sm:$0xff]
      %v951 = vld [vmem:[#allocation2 + $0x8] sm:$0xff]
      %v952 = vld [vmem:[#allocation2 + $0x10] sm:$0xff]
      %v953 = vld [vmem:[#allocation2 + $0x18] sm:$0xff]
      %v954 = vld [vmem:[#allocation2 + $0x20] sm:$0xff]
      %v955 = vld [vmem:[#allocation2 + $0x28] sm:$0xff]
      %v956 = vld [vmem:[#allocation2 + $0x30] sm:$0xff]
      %v957 = vld [vmem:[#allocation2 + $0x38] sm:$0xff]
      %v958 = vld [vmem:[#allocation2 + $0x40] sm:$0xff]
      %v959 = vld [vmem:[#allocation2 + $0x48] sm:$0xff]
      %v960 = vld [vmem:[#allocation2 + $0x50] sm:$0xff]
      %v961 = vld [vmem:[#allocation2 + $0x58] sm:$0xff]
      %v962 = vld [vmem:[#allocation2 + $0x60] sm:$0xff]
      %v963 = vld [vmem:[#allocation2 + $0x68] sm:$0xff]
      %v964 = vld [vmem:[#allocation2 + $0x70] sm:$0xff]
      %v965 = vld [vmem:[#allocation2 + $0x78] sm:$0xff]
      %v966 = vld [vmem:[#allocation2 + $0x80] sm:$0xff]
      %v967 = vld [vmem:[#allocation2 + $0x88] sm:$0xff]
      %v968 = vld [vmem:[#allocation2 + $0x90] sm:$0xff]
      %v969 = vld [vmem:[#allocation2 + $0x98] sm:$0xff]
      %v970 = vld [vmem:[#allocation2 + $0xa0] sm:$0xff]
      %v971 = vld [vmem:[#allocation2 + $0xa8] sm:$0xff]
      %v972 = vld [vmem:[#allocation2 + $0xb0] sm:$0xff]
      %v973 = vld [vmem:[#allocation2 + $0xb8] sm:$0xff]
      %v974 = vld [vmem:[#allocation2 + $0xc0] sm:$0xff]
      %v975 = vld [vmem:[#allocation2 + $0xc8] sm:$0xff]
      %v976 = vld [vmem:[#allocation2 + $0xd0] sm:$0xff]
      %v977 = vld [vmem:[#allocation2 + $0xd8] sm:$0xff]
      %v978 = vld [vmem:[#allocation2 + $0xe0] sm:$0xff]
      %v979 = vld [vmem:[#allocation2 + $0xe8] sm:$0xff]
      %v980 = vld [vmem:[#allocation2 + $0xf0] sm:$0xff]
      %v981 = vld [vmem:[#allocation2 + $0xf8] sm:$0xff]
      %v982 = vld [vmem:[%s4] sm:$0xff]
      %v983 = vld [vmem:[%s4 + $0x8] sm:$0xff]
      %v984 = vld [vmem:[%s4 + $0x10] sm:$0xff]
      %v985 = vld [vmem:[%s4 + $0x18] sm:$0xff]
      %v986 = vld [vmem:[%s4 + $0x20] sm:$0xff]
      %v987 = vld [vmem:[%s4 + $0x28] sm:$0xff]
      %v988 = vld [vmem:[%s4 + $0x30] sm:$0xff]
      %v989 = vld [vmem:[%s4 + $0x38] sm:$0xff]
      %v990 = vld [vmem:[%s4 + $0x40] sm:$0xff]
      %v991 = vld [vmem:[%s4 + $0x48] sm:$0xff]
      %v992 = vld [vmem:[%s4 + $0x50] sm:$0xff]
      %v993 = vld [vmem:[%s4 + $0x58] sm:$0xff]
      %v994 = vld [vmem:[%s4 + $0x60] sm:$0xff]
      %v995 = vld [vmem:[%s4 + $0x68] sm:$0xff]
      %v996 = vld [vmem:[%s4 + $0x70] sm:$0xff]
      %v997 = vld [vmem:[%s4 + $0x78] sm:$0xff]
      %v998 = vld [vmem:[%s4 + $0x80] sm:$0xff]
      %v999 = vld [vmem:[%s4 + $0x88] sm:$0xff]
      %v1000 = vld [vmem:[%s4 + $0x90] sm:$0xff]
      %v1001 = vld [vmem:[%s4 + $0x98] sm:$0xff]
      %v1002 = vld [vmem:[%s4 + $0xa0] sm:$0xff]
      %v1003 = vld [vmem:[%s4 + $0xa8] sm:$0xff]
      %v1004 = vld [vmem:[%s4 + $0xb0] sm:$0xff]
      %v1005 = vld [vmem:[%s4 + $0xb8] sm:$0xff]
      %v1006 = vld [vmem:[%s4 + $0xc0] sm:$0xff]
      %v1007 = vld [vmem:[%s4 + $0xc8] sm:$0xff]
      %v1008 = vld [vmem:[%s4 + $0xd0] sm:$0xff]
      %v1009 = vld [vmem:[%s4 + $0xd8] sm:$0xff]
      %v1010 = vld [vmem:[%s4 + $0xe0] sm:$0xff]
      %v1011 = vld [vmem:[%s4 + $0xe8] sm:$0xff]
      %v1012 = vld [vmem:[%s4 + $0xf0] sm:$0xff]
      %v1013 = vld [vmem:[%s4 + $0xf8] sm:$0xff]
      %1015 = vset.pattern.permute.xlu0 0
      %1016 = vperm.xlu0 %1015, %v982
      %v1017 = vpop.permute.xlu0 %1016
      %1020 = vset.pattern.permute.xlu0 0
      %1021 = vperm.xlu0 %1020, %v983
      %v1022 = vpop.permute.xlu0 %1021
      %1025 = vset.pattern.permute.xlu0 0
      %1026 = vperm.xlu0 %1025, %v984
      %v1027 = vpop.permute.xlu0 %1026
      %1030 = vset.pattern.permute.xlu0 0
      %1031 = vperm.xlu0 %1030, %v985
      %v1032 = vpop.permute.xlu0 %1031
      %1035 = vset.pattern.permute.xlu0 0
      %1036 = vperm.xlu0 %1035, %v986
      %v1037 = vpop.permute.xlu0 %1036
      %1040 = vset.pattern.permute.xlu0 0
      %1041 = vperm.xlu0 %1040, %v987
      %v1042 = vpop.permute.xlu0 %1041
      %1045 = vset.pattern.permute.xlu0 0
      %1046 = vperm.xlu0 %1045, %v988
      %v1047 = vpop.permute.xlu0 %1046
      %1050 = vset.pattern.permute.xlu0 0
      %1051 = vperm.xlu0 %1050, %v989
      %v1052 = vpop.permute.xlu0 %1051
      %1055 = vset.pattern.permute.xlu0 0
      %1056 = vperm.xlu0 %1055, %v990
      %v1057 = vpop.permute.xlu0 %1056
      %1060 = vset.pattern.permute.xlu0 0
      %1061 = vperm.xlu0 %1060, %v991
      %v1062 = vpop.permute.xlu0 %1061
      %1065 = vset.pattern.permute.xlu0 0
      %1066 = vperm.xlu0 %1065, %v992
      %v1067 = vpop.permute.xlu0 %1066
      %1070 = vset.pattern.permute.xlu0 0
      %1071 = vperm.xlu0 %1070, %v993
      %v1072 = vpop.permute.xlu0 %1071
      %1075 = vset.pattern.permute.xlu0 0
      %1076 = vperm.xlu0 %1075, %v994
      %v1077 = vpop.permute.xlu0 %1076
      %1080 = vset.pattern.permute.xlu0 0
      %1081 = vperm.xlu0 %1080, %v995
      %v1082 = vpop.permute.xlu0 %1081
      %1085 = vset.pattern.permute.xlu0 0
      %1086 = vperm.xlu0 %1085, %v996
      %v1087 = vpop.permute.xlu0 %1086
      %1090 = vset.pattern.permute.xlu0 0
      %1091 = vperm.xlu0 %1090, %v997
      %v1092 = vpop.permute.xlu0 %1091
      %1095 = vset.pattern.permute.xlu0 0
      %1096 = vperm.xlu0 %1095, %v998
      %v1097 = vpop.permute.xlu0 %1096
      %1100 = vset.pattern.permute.xlu0 0
      %1101 = vperm.xlu0 %1100, %v999
      %v1102 = vpop.permute.xlu0 %1101
      %1105 = vset.pattern.permute.xlu0 0
      %1106 = vperm.xlu0 %1105, %v1000
      %v1107 = vpop.permute.xlu0 %1106
      %1110 = vset.pattern.permute.xlu0 0
      %1111 = vperm.xlu0 %1110, %v1001
      %v1112 = vpop.permute.xlu0 %1111
      %1115 = vset.pattern.permute.xlu0 0
      %1116 = vperm.xlu0 %1115, %v1002
      %v1117 = vpop.permute.xlu0 %1116
      %1120 = vset.pattern.permute.xlu0 0
      %1121 = vperm.xlu0 %1120, %v1003
      %v1122 = vpop.permute.xlu0 %1121
      %1125 = vset.pattern.permute.xlu0 0
      %1126 = vperm.xlu0 %1125, %v1004
      %v1127 = vpop.permute.xlu0 %1126
      %1130 = vset.pattern.permute.xlu0 0
      %1131 = vperm.xlu0 %1130, %v1005
      %v1132 = vpop.permute.xlu0 %1131
      %1135 = vset.pattern.permute.xlu0 0
      %1136 = vperm.xlu0 %1135, %v1006
      %v1137 = vpop.permute.xlu0 %1136
      %1140 = vset.pattern.permute.xlu0 0
      %1141 = vperm.xlu0 %1140, %v1007
      %v1142 = vpop.permute.xlu0 %1141
      %1145 = vset.pattern.permute.xlu0 0
      %1146 = vperm.xlu0 %1145, %v1008
      %v1147 = vpop.permute.xlu0 %1146
      %1150 = vset.pattern.permute.xlu0 0
      %1151 = vperm.xlu0 %1150, %v1009
      %v1152 = vpop.permute.xlu0 %1151
      %1155 = vset.pattern.permute.xlu0 0
      %1156 = vperm.xlu0 %1155, %v1010
      %v1157 = vpop.permute.xlu0 %1156
      %1160 = vset.pattern.permute.xlu0 0
      %1161 = vperm.xlu0 %1160, %v1011
      %v1162 = vpop.permute.xlu0 %1161
      %1165 = vset.pattern.permute.xlu0 0
      %1166 = vperm.xlu0 %1165, %v1012
      %v1167 = vpop.permute.xlu0 %1166
      %1170 = vset.pattern.permute.xlu0 0
      %1171 = vperm.xlu0 %1170, %v1013
      %v1172 = vpop.permute.xlu0 %1171
      %v1174 = vadd.f32 %v950, %v1017
      %v1175 = vadd.f32 %v951, %v1022
      %v1176 = vadd.f32 %v952, %v1027
      %v1177 = vadd.f32 %v953, %v1032
      %v1178 = vadd.f32 %v954, %v1037
      %v1179 = vadd.f32 %v955, %v1042
      %v1180 = vadd.f32 %v956, %v1047
      %v1181 = vadd.f32 %v957, %v1052
      %v1182 = vadd.f32 %v958, %v1057
      %v1183 = vadd.f32 %v959, %v1062
      %v1184 = vadd.f32 %v960, %v1067
      %v1185 = vadd.f32 %v961, %v1072
      %v1186 = vadd.f32 %v962, %v1077
      %v1187 = vadd.f32 %v963, %v1082
      %v1188 = vadd.f32 %v964, %v1087
      %v1189 = vadd.f32 %v965, %v1092
      %v1190 = vadd.f32 %v966, %v1097
      %v1191 = vadd.f32 %v967, %v1102
      %v1192 = vadd.f32 %v968, %v1107
      %v1193 = vadd.f32 %v969, %v1112
      %v1194 = vadd.f32 %v970, %v1117
      %v1195 = vadd.f32 %v971, %v1122
      %v1196 = vadd.f32 %v972, %v1127
      %v1197 = vadd.f32 %v973, %v1132
      %v1198 = vadd.f32 %v974, %v1137
      %v1199 = vadd.f32 %v975, %v1142
      %v1200 = vadd.f32 %v976, %v1147
      %v1201 = vadd.f32 %v977, %v1152
      %v1202 = vadd.f32 %v978, %v1157
      %v1203 = vadd.f32 %v979, %v1162
      %v1204 = vadd.f32 %v980, %v1167
      %v1205 = vadd.f32 %v981, %v1172
      %1206 = vst [vmem:[#allocation2] sm:$0xff] %v1174
      %1207 = vst [vmem:[#allocation2 + $0x8] sm:$0xff] %v1175
      %1208 = vst [vmem:[#allocation2 + $0x10] sm:$0xff] %v1176
      %1209 = vst [vmem:[#allocation2 + $0x18] sm:$0xff] %v1177
      %1210 = vst [vmem:[#allocation2 + $0x20] sm:$0xff] %v1178
      %1211 = vst [vmem:[#allocation2 + $0x28] sm:$0xff] %v1179
      %1212 = vst [vmem:[#allocation2 + $0x30] sm:$0xff] %v1180
      %1213 = vst [vmem:[#allocation2 + $0x38] sm:$0xff] %v1181
      %1214 = vst [vmem:[#allocation2 + $0x40] sm:$0xff] %v1182
      %1215 = vst [vmem:[#allocation2 + $0x48] sm:$0xff] %v1183
      %1216 = vst [vmem:[#allocation2 + $0x50] sm:$0xff] %v1184
      %1217 = vst [vmem:[#allocation2 + $0x58] sm:$0xff] %v1185
      %1218 = vst [vmem:[#allocation2 + $0x60] sm:$0xff] %v1186
      %1219 = vst [vmem:[#allocation2 + $0x68] sm:$0xff] %v1187
      %1220 = vst [vmem:[#allocation2 + $0x70] sm:$0xff] %v1188
      %1221 = vst [vmem:[#allocation2 + $0x78] sm:$0xff] %v1189
      %1222 = vst [vmem:[#allocation2 + $0x80] sm:$0xff] %v1190
      %1223 = vst [vmem:[#allocation2 + $0x88] sm:$0xff] %v1191
      %1224 = vst [vmem:[#allocation2 + $0x90] sm:$0xff] %v1192
      %1225 = vst [vmem:[#allocation2 + $0x98] sm:$0xff] %v1193
      %1226 = vst [vmem:[#allocation2 + $0xa0] sm:$0xff] %v1194
      %1227 = vst [vmem:[#allocation2 + $0xa8] sm:$0xff] %v1195
      %1228 = vst [vmem:[#allocation2 + $0xb0] sm:$0xff] %v1196
      %1229 = vst [vmem:[#allocation2 + $0xb8] sm:$0xff] %v1197
      %1230 = vst [vmem:[#allocation2 + $0xc0] sm:$0xff] %v1198
      %1231 = vst [vmem:[#allocation2 + $0xc8] sm:$0xff] %v1199
      %1232 = vst [vmem:[#allocation2 + $0xd0] sm:$0xff] %v1200
      %1233 = vst [vmem:[#allocation2 + $0xd8] sm:$0xff] %v1201
      %1234 = vst [vmem:[#allocation2 + $0xe0] sm:$0xff] %v1202
      %1235 = vst [vmem:[#allocation2 + $0xe8] sm:$0xff] %v1203
      %1236 = vst [vmem:[#allocation2 + $0xf0] sm:$0xff] %v1204
      %1237 = vst [vmem:[#allocation2 + $0xf8] sm:$0xff] %v1205
    $region40: #{tpu_custom_call.1} parent=1 // pred_fallthru
      _
    // Predicated region
    $region41: #{tpu_custom_call.1} parent=1 // pred_check
      _
    $region42: #{tpu_custom_call.1} parent=1 // pred_check_branch
      %1239 = sbr.rel (0) target = $region44
    $region43: #{tpu_custom_call.1} parent=1 // pred_region
      %s1241 = ssub.s32 4096, 4096
      %1242 = vsyncadd [#allocation3], %s1241
      %s1243 = sshll.u32 [#allocation2], 4
      %s1244 = int_to_ptr.vmem [resolvable:$true] %s1243
      %1249 = dma.vmem_to_hbm [thread:$0]  %s1244, 4096, %s5, [#allocation3], 128, 128, 8
    $region44: #{tpu_custom_call.1} parent=1 // pred_fallthru
      _
    // Predicated region
    $region45: #{tpu_custom_call.1} parent=1 // pred_check
      _
    $region46: #{tpu_custom_call.1} parent=1 // pred_check_branch
      %1251 = sbr.rel (0) target = $region48
    $region47: #{tpu_custom_call.1} parent=1 // pred_region
      %1252 = dma.done [#allocation3], 4096
    $region48: #{tpu_custom_call.1} parent=1 // pred_fallthru
      _
    %1253 = vsyncpa [#allocation3], 1

</llo_original>
